<compile_context>
chip_gen: v7x
topology: tpu7x:2x2x1
jax: 0.10.0
libtpu: 0.0.40
codegen_flags: <defaults>
</compile_context>

<pallas_src>
import jax
import jax.numpy as jnp
from jax.experimental import pallas as pl
from jax.experimental.pallas import tpu as pltpu

EPSILON = 1e-08  # parity with the PyTorch module (only used by reverse(), not forward()).


def make_vp_lattice_buffers(num_steps=1000, s=0.0001, power=2, clipmax=0.999):
    """Deterministic recreation of the VP_lattice registered buffers."""
    t = jnp.arange(0, num_steps + 1, dtype=jnp.float32)
    f_t = jnp.cos(jnp.pi / 2.0 * (t / num_steps + s) / (1.0 + s)) ** power
    alpha_bars = f_t / f_t[0]
    betas = jnp.concatenate(
        [jnp.zeros([1], jnp.float32), 1.0 - alpha_bars[1:] / alpha_bars[:-1]], axis=0
    )
    betas = jnp.minimum(betas, clipmax)
    sigmas = jnp.sqrt(betas[1:] * ((1.0 - alpha_bars[:-1]) / (1.0 - alpha_bars[1:])))
    sigmas = jnp.concatenate([jnp.zeros([1], jnp.float32), sigmas], axis=0)
    return alpha_bars, betas, sigmas


# --------------------------------------------------------------------------- #
# Kernels
# --------------------------------------------------------------------------- #
def _vp_fwd_rng_kernel(seed_ref, sa_ref, sb_ref, h0_ref, ht_ref, eps_ref):
    """ht = sa*h0 + sb*eps, with eps drawn from the TPU hardware PRNG.

    seed_ref : SMEM int32 [1]    (scalar prefetch)
    sa_ref   : VMEM f32 (TB, 1)  sqrt(alpha_bar)      per row
    sb_ref   : VMEM f32 (TB, 1)  sqrt(1 - alpha_bar)  per row
    h0_ref   : VMEM (TB, D)
    ht_ref   : VMEM (TB, D)      output
    eps_ref  : VMEM (TB, D)      output
    """
    # Per-block seed => every batch tile draws independent, reproducible noise
    # regardless of which TensorCore executes it under the "parallel" grid.
    pltpu.prng_seed(seed_ref[0] + pl.program_id(0))
    eps = pltpu.stateful_normal(h0_ref.shape, jnp.float32).astype(eps_ref.dtype)
    eps_ref[...] = eps
    ht = (sa_ref[...] * h0_ref[...].astype(jnp.float32)
          + sb_ref[...] * eps.astype(jnp.float32))
    ht_ref[...] = ht.astype(ht_ref.dtype)


def _vp_fwd_eps_kernel(sa_ref, sb_ref, h0_ref, eps_ref, ht_ref):
    """Fallback: eps supplied from outside (jax.random.normal). Same dense FMA."""
    ht = (sa_ref[...] * h0_ref[...].astype(jnp.float32)
          + sb_ref[...] * eps_ref[...].astype(jnp.float32))
    ht_ref[...] = ht.astype(ht_ref.dtype)


# --------------------------------------------------------------------------- #
# Wrappers
# --------------------------------------------------------------------------- #
def _pick_batch_tile(B):
    # Whole batch for small B; otherwise a sublane-aligned tile that keeps
    # inputs + outputs (double-buffered) comfortably inside scoped VMEM, v7x included.
    if B <= 256:
        return B
    if B % 256 == 0:
        return 256
    return B  # awkward sizes: whole-batch block (still tiny for lattice D=6)


def _forward_rng(seed, sa, sb, h0, tb):
    B, D = h0.shape
    return pl.pallas_call(
        _vp_fwd_rng_kernel,
        out_shape=(
            jax.ShapeDtypeStruct((B, D), h0.dtype),   # ht
            jax.ShapeDtypeStruct((B, D), h0.dtype),   # eps
        ),
        grid_spec=pltpu.PrefetchScalarGridSpec(
            num_scalar_prefetch=1,
            grid=(B // tb,),
            in_specs=[
                pl.BlockSpec((tb, 1), lambda i, seed_ref: (i, 0)),  # sa
                pl.BlockSpec((tb, 1), lambda i, seed_ref: (i, 0)),  # sb
                pl.BlockSpec((tb, D), lambda i, seed_ref: (i, 0)),  # h0
            ],
            out_specs=[
                pl.BlockSpec((tb, D), lambda i, seed_ref: (i, 0)),  # ht
                pl.BlockSpec((tb, D), lambda i, seed_ref: (i, 0)),  # eps
            ],
        ),
        compiler_params=pltpu.CompilerParams(dimension_semantics=("parallel",)),
    )(seed, sa, sb, h0)


def _forward_eps(sa, sb, h0, eps, tb):
    B, D = h0.shape
    return pl.pallas_call(
        _vp_fwd_eps_kernel,
        out_shape=jax.ShapeDtypeStruct((B, D), h0.dtype),
        grid_spec=pltpu.PrefetchScalarGridSpec(
            num_scalar_prefetch=0,
            grid=(B // tb,),
            in_specs=[
                pl.BlockSpec((tb, 1), lambda i: (i, 0)),  # sa
                pl.BlockSpec((tb, 1), lambda i: (i, 0)),  # sb
                pl.BlockSpec((tb, D), lambda i: (i, 0)),  # h0
                pl.BlockSpec((tb, D), lambda i: (i, 0)),  # eps
            ],
            out_specs=pl.BlockSpec((tb, D), lambda i: (i, 0)),
        ),
        compiler_params=pltpu.CompilerParams(dimension_semantics=("parallel",)),
    )(sa, sb, h0, eps)


def vp_lattice_forward(h0, t, alpha_bars, key):
    """Equivalent of VP_lattice.forward(h0, t) -> (ht, eps)."""
    # Tiny [B] gather + sqrt stays in XLA: the big (B, D) arrays still see
    # exactly one read / one write each, and the kernel body is a pure FMA.
    ab = alpha_bars[t.astype(jnp.int32)].astype(jnp.float32)
    sa = jnp.sqrt(ab)[:, None]          # (B, 1)
    sb = jnp.sqrt(1.0 - ab)[:, None]    # (B, 1)
    tb = _pick_batch_tile(h0.shape[0])

    try:
        seed = jax.random.randint(key, (1,), 0, jnp.iinfo(jnp.int32).max,
                                  dtype=jnp.int32)
        ht, eps = _forward_rng(seed, sa, sb, h0, tb)
        jax.block_until_ready((ht, eps))
        return ht, eps
    except Exception:
        # Robust fallback: draw eps with jax.random and stream it through the
        # dense-FMA kernel (same math, one extra HBM round-trip for eps).
        eps = jax.random.normal(key, h0.shape, dtype=h0.dtype)
        ht = _forward_eps(sa, sb, h0, eps, tb)
        return ht, eps


def _reference_forward(h0, t, alpha_bars, eps):
    ab = alpha_bars[t]
    return jnp.sqrt(ab)[:, None] * h0 + jnp.sqrt(1.0 - ab)[:, None] * eps


if __name__ == "__main__":
    num_steps = 1000
    alpha_bars, betas, sigmas = make_vp_lattice_buffers(num_steps=num_steps)

    # ---- module-natural small shapes: batch=2 lattices, D=6 components ---- #
    B, D = 2, 6
    key = jax.random.PRNGKey(0)
    k_h0, k_eps = jax.random.split(key)
    h0 = jax.random.normal(k_h0, (B, D), dtype=jnp.float32)
    t = jnp.array([10, 500], dtype=jnp.int32)

    ht, eps = vp_lattice_forward(h0, t, alpha_bars, k_eps)
    ht, eps = jax.block_until_ready((ht, eps))

    assert ht.shape == (B, D) and eps.shape == (B, D)
    assert bool(jnp.all(jnp.isfinite(ht))) and bool(jnp.all(jnp.isfinite(eps)))
    ref = _reference_forward(h0, t, alpha_bars, eps)
    assert jnp.allclose(ht, ref, atol=1e-5, rtol=1e-5), "mismatch vs reference"

    # ---- larger batch: exercises the parallel batch grid + noise stats ----- #
    B2 = 512
    kb, kt, ke = jax.random.split(jax.random.PRNGKey(1), 3)
    h0_big = jax.random.normal(kb, (B2, D), dtype=jnp.float32)
    t_big = jax.random.randint(kt, (B2,), 1, num_steps + 1, dtype=jnp.int32)

    ht_b, eps_b = vp_lattice_forward(h0_big, t_big, alpha_bars, ke)
    ht_b, eps_b = jax.block_until_ready((ht_b, eps_b))

    ref_b = _reference_forward(h0_big, t_big, alpha_bars, eps_b)
    assert jnp.allclose(ht_b, ref_b, atol=1e-5, rtol=1e-5), "mismatch (big batch)"
    assert abs(float(jnp.mean(eps_b))) < 0.2, "eps mean looks wrong"
    assert abs(float(jnp.std(eps_b)) - 1.0) < 0.2, "eps std looks wrong"
    assert not bool(jnp.allclose(eps_b[:B2 // 2], eps_b[B2 // 2:])), \
        "noise must differ across grid blocks"

    print("KERNEL_OK")
</pallas_src>

<mosaic_0001>
module attributes {stable_mosaic.version = 11 : i64} {
  func.func @_vp_fwd_rng_kernel(%arg0: i32, %arg1: memref<1xi32, #tpu.memory_space<smem>>, %arg2: memref<2x1xf32, #tpu.memory_space<vmem>>, %arg3: memref<2x1xf32, #tpu.memory_space<vmem>>, %arg4: memref<2x6xf32, #tpu.memory_space<vmem>>, %arg5: memref<2x6xf32, #tpu.memory_space<vmem>>, %arg6: memref<2x6xf32, #tpu.memory_space<vmem>>) attributes {dimension_semantics = [#tpu.dimension_semantics<parallel>], iteration_bounds = array<i64: 1>, scalar_prefetch = 1 : i64, scratch_operands = 0 : i64, tpu.core_type = #tpu.core_type<tc>, window_params = [{transform_indices = @transform_0, window_bounds = array<i64: 2, 1>}, {transform_indices = @transform_1, window_bounds = array<i64: 2, 1>}, {transform_indices = @transform_2, window_bounds = array<i64: 2, 6>}, {transform_indices = @transform_3, window_bounds = array<i64: 2, 6>}, {transform_indices = @transform_4, window_bounds = array<i64: 2, 6>}]} {
    %c0 = arith.constant 0 : index
    %0 = memref.load %arg1[%c0] : memref<1xi32, #tpu.memory_space<smem>>
    %1 = arith.addi %0, %arg0 : i32
    "tpu.prng_set_seed_32"(%1) : (i32) -> ()
    %c0_i32 = arith.constant 0 : i32
    %c0_i32_0 = arith.constant 0 : i32
    %cst = arith.constant -0.99999994 : f32
    %cst_1 = arith.constant 1.000000e+00 : f32
    %2 = vector.broadcast %cst : f32 to vector<1x1xf32>
    %3 = vector.broadcast %cst_1 : f32 to vector<1x1xf32>
    %4 = "tpu.prng_random_bits"() : () -> vector<2x6xi32>
    %c9_i32 = arith.constant 9 : i32
    %5 = vector.broadcast %c9_i32 : i32 to vector<2x6xi32>
    %6 = arith.shrui %4, %5 : vector<2x6xi32>
    %c1065353216_i32 = arith.constant 1065353216 : i32
    %7 = vector.broadcast %c1065353216_i32 : i32 to vector<2x6xi32>
    %8 = arith.ori %6, %7 : vector<2x6xi32>
    %9 = tpu.bitcast %8 : vector<2x6xi32> -> vector<2x6xf32>
    %cst_2 = arith.constant 1.000000e+00 : f32
    %10 = vector.broadcast %cst_2 : f32 to vector<2x6xf32>
    %11 = arith.subf %9, %10 : vector<2x6xf32>
    %12 = arith.subf %3, %2 : vector<1x1xf32>
    %13 = vector.broadcast %12 : vector<1x1xf32> to vector<2x6xf32>
    %14 = arith.mulf %11, %13 : vector<2x6xf32>
    %15 = vector.broadcast %2 : vector<1x1xf32> to vector<2x6xf32>
    %16 = arith.addf %14, %15 : vector<2x6xf32>
    %17 = vector.broadcast %2 : vector<1x1xf32> to vector<2x6xf32>
    %18 = arith.maximumf %17, %16 : vector<2x6xf32>
    %cst_3 = arith.constant 0.000000e+00 : f32
    %19 = vector.broadcast %cst_3 : f32 to vector<2x6xf32>
    %20 = arith.subf %19, %18 : vector<2x6xf32>
    %21 = arith.mulf %18, %20 : vector<2x6xf32>
    %22 = math.log1p %21 : vector<2x6xf32>
    %cst_4 = arith.constant 0.000000e+00 : f32
    %23 = vector.broadcast %cst_4 : f32 to vector<2x6xf32>
    %24 = arith.subf %23, %22 : vector<2x6xf32>
    %cst_5 = arith.constant 5.000000e+00 : f32
    %25 = vector.broadcast %cst_5 : f32 to vector<2x6xf32>
    %26 = arith.cmpf olt, %24, %25 : vector<2x6xf32>
    %cst_6 = arith.constant 2.500000e+00 : f32
    %27 = vector.broadcast %cst_6 : f32 to vector<2x6xf32>
    %28 = arith.subf %24, %27 : vector<2x6xf32>
    %29 = math.sqrt %24 : vector<2x6xf32>
    %cst_7 = arith.constant 3.000000e+00 : f32
    %30 = vector.broadcast %cst_7 : f32 to vector<2x6xf32>
    %31 = arith.subf %29, %30 : vector<2x6xf32>
    %32 = arith.select %26, %28, %31 : vector<2x6xi1>, vector<2x6xf32>
    %cst_8 = arith.constant 2.81022636E-8 : f32
    %cst_9 = arith.constant -2.00214257E-4 : f32
    %33 = vector.broadcast %cst_8 : f32 to vector<2x6xf32>
    %34 = vector.broadcast %cst_9 : f32 to vector<2x6xf32>
    %35 = arith.select %26, %33, %34 : vector<2x6xi1>, vector<2x6xf32>
    %cst_10 = arith.constant 3.43273939E-7 : f32
    %cst_11 = arith.constant 1.00950558E-4 : f32
    %36 = vector.broadcast %cst_10 : f32 to vector<2x6xf32>
    %37 = vector.broadcast %cst_11 : f32 to vector<2x6xf32>
    %38 = arith.select %26, %36, %37 : vector<2x6xi1>, vector<2x6xf32>
    %39 = arith.mulf %35, %32 : vector<2x6xf32>
    %40 = arith.addf %38, %39 : vector<2x6xf32>
    %cst_12 = arith.constant -3.5233877E-6 : f32
    %cst_13 = arith.constant 0.00134934322 : f32
    %41 = vector.broadcast %cst_12 : f32 to vector<2x6xf32>
    %42 = vector.broadcast %cst_13 : f32 to vector<2x6xf32>
    %43 = arith.select %26, %41, %42 : vector<2x6xi1>, vector<2x6xf32>
    %44 = arith.mulf %40, %32 : vector<2x6xf32>
    %45 = arith.addf %43, %44 : vector<2x6xf32>
    %cst_14 = arith.constant -4.39150654E-6 : f32
    %cst_15 = arith.constant -0.00367342844 : f32
    %46 = vector.broadcast %cst_14 : f32 to vector<2x6xf32>
    %47 = vector.broadcast %cst_15 : f32 to vector<2x6xf32>
    %48 = arith.select %26, %46, %47 : vector<2x6xi1>, vector<2x6xf32>
    %49 = arith.mulf %45, %32 : vector<2x6xf32>
    %50 = arith.addf %48, %49 : vector<2x6xf32>
    %cst_16 = arith.constant 2.1858087E-4 : f32
    %cst_17 = arith.constant 0.00573950773 : f32
    %51 = vector.broadcast %cst_16 : f32 to vector<2x6xf32>
    %52 = vector.broadcast %cst_17 : f32 to vector<2x6xf32>
    %53 = arith.select %26, %51, %52 : vector<2x6xi1>, vector<2x6xf32>
    %54 = arith.mulf %50, %32 : vector<2x6xf32>
    %55 = arith.addf %53, %54 : vector<2x6xf32>
    %cst_18 = arith.constant -0.00125372503 : f32
    %cst_19 = arith.constant -0.0076224613 : f32
    %56 = vector.broadcast %cst_18 : f32 to vector<2x6xf32>
    %57 = vector.broadcast %cst_19 : f32 to vector<2x6xf32>
    %58 = arith.select %26, %56, %57 : vector<2x6xi1>, vector<2x6xf32>
    %59 = arith.mulf %55, %32 : vector<2x6xf32>
    %60 = arith.addf %58, %59 : vector<2x6xf32>
    %cst_20 = arith.constant -0.00417768164 : f32
    %cst_21 = arith.constant 0.00943887047 : f32
    %61 = vector.broadcast %cst_20 : f32 to vector<2x6xf32>
    %62 = vector.broadcast %cst_21 : f32 to vector<2x6xf32>
    %63 = arith.select %26, %61, %62 : vector<2x6xi1>, vector<2x6xf32>
    %64 = arith.mulf %60, %32 : vector<2x6xf32>
    %65 = arith.addf %63, %64 : vector<2x6xf32>
    %cst_22 = arith.constant 0.246640727 : f32
    %cst_23 = arith.constant 1.00167406 : f32
    %66 = vector.broadcast %cst_22 : f32 to vector<2x6xf32>
    %67 = vector.broadcast %cst_23 : f32 to vector<2x6xf32>
    %68 = arith.select %26, %66, %67 : vector<2x6xi1>, vector<2x6xf32>
    %69 = arith.mulf %65, %32 : vector<2x6xf32>
    %70 = arith.addf %68, %69 : vector<2x6xf32>
    %cst_24 = arith.constant 1.50140941 : f32
    %cst_25 = arith.constant 2.83297682 : f32
    %71 = vector.broadcast %cst_24 : f32 to vector<2x6xf32>
    %72 = vector.broadcast %cst_25 : f32 to vector<2x6xf32>
    %73 = arith.select %26, %71, %72 : vector<2x6xi1>, vector<2x6xf32>
    %74 = arith.mulf %70, %32 : vector<2x6xf32>
    %75 = arith.addf %73, %74 : vector<2x6xf32>
    %76 = math.absf %18 : vector<2x6xf32>
    %cst_26 = arith.constant 1.000000e+00 : f32
    %77 = vector.broadcast %cst_26 : f32 to vector<2x6xf32>
    %78 = arith.cmpf oeq, %76, %77 : vector<2x6xf32>
    %cst_27 = arith.constant 0x7F800000 : f32
    %79 = vector.broadcast %cst_27 : f32 to vector<2x6xf32>
    %80 = arith.mulf %79, %18 : vector<2x6xf32>
    %81 = arith.mulf %75, %18 : vector<2x6xf32>
    %82 = arith.select %78, %80, %81 : vector<2x6xi1>, vector<2x6xf32>
    %cst_28 = arith.constant 1.41421354 : f32
    %83 = vector.broadcast %cst_28 : f32 to vector<2x6xf32>
    %84 = arith.mulf %83, %82 : vector<2x6xf32>
    %c0_29 = arith.constant 0 : index
    %c0_30 = arith.constant 0 : index
    %85 = vector.load %arg6[%c0_29, %c0_30] : memref<2x6xf32, #tpu.memory_space<vmem>>, vector<2x6xf32>
    tpu.vector_store %arg6[%c0_29, %c0_30], %84 {strides = array<i32>} : memref<2x6xf32, #tpu.memory_space<vmem>>, vector<2x6xf32>,
    %c0_31 = arith.constant 0 : index
    %c0_32 = arith.constant 0 : index
    %86 = vector.load %arg2[%c0_31, %c0_32] : memref<2x1xf32, #tpu.memory_space<vmem>>, vector<2x1xf32>
    %c0_33 = arith.constant 0 : index
    %c0_34 = arith.constant 0 : index
    %87 = vector.load %arg4[%c0_33, %c0_34] : memref<2x6xf32, #tpu.memory_space<vmem>>, vector<2x6xf32>
    %88 = vector.broadcast %86 : vector<2x1xf32> to vector<2x6xf32>
    %89 = arith.mulf %88, %87 : vector<2x6xf32>
    %c0_35 = arith.constant 0 : index
    %c0_36 = arith.constant 0 : index
    %90 = vector.load %arg3[%c0_35, %c0_36] : memref<2x1xf32, #tpu.memory_space<vmem>>, vector<2x1xf32>
    %91 = vector.broadcast %90 : vector<2x1xf32> to vector<2x6xf32>
    %92 = arith.mulf %91, %84 : vector<2x6xf32>
    %93 = arith.addf %89, %92 : vector<2x6xf32>
    %c0_37 = arith.constant 0 : index
    %c0_38 = arith.constant 0 : index
    %94 = vector.load %arg5[%c0_37, %c0_38] : memref<2x6xf32, #tpu.memory_space<vmem>>, vector<2x6xf32>
    tpu.vector_store %arg5[%c0_37, %c0_38], %93 {strides = array<i32>} : memref<2x6xf32, #tpu.memory_space<vmem>>, vector<2x6xf32>,
    return
  }
  func.func @transform_0(%arg0: i32, %arg1: memref<1xi32, #tpu.memory_space<smem>>) -> (i32, i32) {
    %c0_i32 = arith.constant 0 : i32
    %c0_i32_0 = arith.constant 0 : i32
    return %arg0, %c0_i32 : i32, i32
  }
  func.func @transform_1(%arg0: i32, %arg1: memref<1xi32, #tpu.memory_space<smem>>) -> (i32, i32) {
    %c0_i32 = arith.constant 0 : i32
    %c0_i32_0 = arith.constant 0 : i32
    return %arg0, %c0_i32 : i32, i32
  }
  func.func @transform_2(%arg0: i32, %arg1: memref<1xi32, #tpu.memory_space<smem>>) -> (i32, i32) {
    %c0_i32 = arith.constant 0 : i32
    %c0_i32_0 = arith.constant 0 : i32
    return %arg0, %c0_i32 : i32, i32
  }
  func.func @transform_3(%arg0: i32, %arg1: memref<1xi32, #tpu.memory_space<smem>>) -> (i32, i32) {
    %c0_i32 = arith.constant 0 : i32
    %c0_i32_0 = arith.constant 0 : i32
    return %arg0, %c0_i32 : i32, i32
  }
  func.func @transform_4(%arg0: i32, %arg1: memref<1xi32, #tpu.memory_space<smem>>) -> (i32, i32) {
    %c0_i32 = arith.constant 0 : i32
    %c0_i32_0 = arith.constant 0 : i32
    return %arg0, %c0_i32 : i32, i32
  }
}

module attributes {stable_mosaic.version = 11 : i64} {
  func.func @_vp_fwd_eps_kernel(%arg0: i32, %arg1: memref<2x1xf32, #tpu.memory_space<vmem>>, %arg2: memref<2x1xf32, #tpu.memory_space<vmem>>, %arg3: memref<2x6xf32, #tpu.memory_space<vmem>>, %arg4: memref<2x6xf32, #tpu.memory_space<vmem>>, %arg5: memref<2x6xf32, #tpu.memory_space<vmem>>) attributes {dimension_semantics = [#tpu.dimension_semantics<parallel>], iteration_bounds = array<i64: 1>, scalar_prefetch = 0 : i64, scratch_operands = 0 : i64, tpu.core_type = #tpu.core_type<tc>, window_params = [{transform_indices = @transform_0, window_bounds = array<i64: 2, 1>}, {transform_indices = @transform_1, window_bounds = array<i64: 2, 1>}, {transform_indices = @transform_2, window_bounds = array<i64: 2, 6>}, {transform_indices = @transform_3, window_bounds = array<i64: 2, 6>}, {transform_indices = @transform_4, window_bounds = array<i64: 2, 6>}]} {
    %c0 = arith.constant 0 : index
    %c0_0 = arith.constant 0 : index
    %0 = vector.load %arg1[%c0, %c0_0] : memref<2x1xf32, #tpu.memory_space<vmem>>, vector<2x1xf32>
    %c0_1 = arith.constant 0 : index
    %c0_2 = arith.constant 0 : index
    %1 = vector.load %arg3[%c0_1, %c0_2] : memref<2x6xf32, #tpu.memory_space<vmem>>, vector<2x6xf32>
    %2 = vector.broadcast %0 : vector<2x1xf32> to vector<2x6xf32>
    %3 = arith.mulf %2, %1 : vector<2x6xf32>
    %c0_3 = arith.constant 0 : index
    %c0_4 = arith.constant 0 : index
    %4 = vector.load %arg2[%c0_3, %c0_4] : memref<2x1xf32, #tpu.memory_space<vmem>>, vector<2x1xf32>
    %c0_5 = arith.constant 0 : index
    %c0_6 = arith.constant 0 : index
    %5 = vector.load %arg4[%c0_5, %c0_6] : memref<2x6xf32, #tpu.memory_space<vmem>>, vector<2x6xf32>
    %6 = vector.broadcast %4 : vector<2x1xf32> to vector<2x6xf32>
    %7 = arith.mulf %6, %5 : vector<2x6xf32>
    %8 = arith.addf %3, %7 : vector<2x6xf32>
    %c0_7 = arith.constant 0 : index
    %c0_8 = arith.constant 0 : index
    %9 = vector.load %arg5[%c0_7, %c0_8] : memref<2x6xf32, #tpu.memory_space<vmem>>, vector<2x6xf32>
    tpu.vector_store %arg5[%c0_7, %c0_8], %8 {strides = array<i32>} : memref<2x6xf32, #tpu.memory_space<vmem>>, vector<2x6xf32>,
    return
  }
  func.func @transform_0(%arg0: i32) -> (i32, i32) {
    %c0_i32 = arith.constant 0 : i32
    %c0_i32_0 = arith.constant 0 : i32
    return %arg0, %c0_i32 : i32, i32
  }
  func.func @transform_1(%arg0: i32) -> (i32, i32) {
    %c0_i32 = arith.constant 0 : i32
    %c0_i32_0 = arith.constant 0 : i32
    return %arg0, %c0_i32 : i32, i32
  }
  func.func @transform_2(%arg0: i32) -> (i32, i32) {
    %c0_i32 = arith.constant 0 : i32
    %c0_i32_0 = arith.constant 0 : i32
    return %arg0, %c0_i32 : i32, i32
  }
  func.func @transform_3(%arg0: i32) -> (i32, i32) {
    %c0_i32 = arith.constant 0 : i32
    %c0_i32_0 = arith.constant 0 : i32
    return %arg0, %c0_i32 : i32, i32
  }
  func.func @transform_4(%arg0: i32) -> (i32, i32) {
    %c0_i32 = arith.constant 0 : i32
    %c0_i32_0 = arith.constant 0 : i32
    return %arg0, %c0_i32 : i32, i32
  }
}

</mosaic_0001>

<llo_original>
// kernel: tpu_custom_call.1
$region0: #{tpu_custom_call.1}
  #allocation0 [shape = 'u32[]', space=smem, size = 0x4, offset = 0x4, fixed_abs, tag = 'smem constant byte address 0x4 - core index']
  #allocation1 [shape = 'u32[144,128]{1,0:T(1,128)}', space=vmem, size = 0x12000, scoped, tag = 'internal scratch']
  #allocation2 [shape = 's32[1]{0}', space=sflag, size = 0x4, scoped, tag = 'scoped memory for tpu_custom_call.1']
  #allocation3 [shape = 's32[1]{0:T(128)S(6)}', space=smem, size = 0x200, scoped, tag = 'prefetched SMEM operand 0']
  %s0 = inlined_call_operand.<no memory space> [shape: s32[1], index: 0, kind: input, shape index: {}]
  %s1 = inlined_call_operand.vmem [shape: f32[2,1], index: 1, kind: input, shape index: {}]
  %s2 = inlined_call_operand.vmem [shape: f32[2,1], index: 2, kind: input, shape index: {}]
  %s3 = inlined_call_operand.vmem [shape: f32[2,6], index: 3, kind: input, shape index: {}]
  %s4 = inlined_call_operand.hbm [shape: f32[2,6], index: 4, kind: output, shape index: {0}]
  %s5 = inlined_call_operand.hbm [shape: f32[2,6], index: 5, kind: output, shape index: {1}]
  %6 = xla_tuple %s4, %s5
  %s7 = sld [smem:[#allocation0]]
  $region30: #{tpu_custom_call.1} parent=0
    _
  %s9 = ssub.s32 1, %s7
  %s10 = scalar_select 0, %s9, %s7
  %11 = sst [smem:[#allocation3]] %s0
  $region1: #{tpu_custom_call.1} parent=0
    #allocation4 [shape = 'u8[1024]{0}', space=vmem, size = 0x400, scoped, tag = 'output window, operand 0, single buffered']
    #allocation5 [shape = 's32[1]{0}', space=sflag, size = 0x4, scoped, tag = 'scoped memory for tpu_custom_call.1']
    #allocation6 [shape = 'u8[1024]{0}', space=vmem, size = 0x400, scoped, tag = 'output window, operand 1, single buffered']
    #allocation7 [shape = 's32[1]{0}', space=sflag, size = 0x4, scoped, tag = 'scoped memory for tpu_custom_call.1']
    %12 = vsyncpa [#allocation5], 0
    %13 = vsyncpa [#allocation7], 0
    // Predicated region
    $region2: #{tpu_custom_call.1} parent=1 // pred_check
      _
    $region3: #{tpu_custom_call.1} parent=1 // pred_check_branch
      %15 = sbr.rel (0) target = $region5
    $region4: #{tpu_custom_call.1} parent=1 // pred_region
      _
    $region5: #{tpu_custom_call.1} parent=1 // pred_fallthru
      _
    // Predicated region
    $region6: #{tpu_custom_call.1} parent=1 // pred_check
      _
    $region7: #{tpu_custom_call.1} parent=1 // pred_check_branch
      %17 = sbr.rel (0) target = $region9
    $region8: #{tpu_custom_call.1} parent=1 // pred_region
      _
    $region9: #{tpu_custom_call.1} parent=1 // pred_fallthru
      _
    // Predicated region
    $region10: #{tpu_custom_call.1} parent=1 // pred_check
      _
    $region11: #{tpu_custom_call.1} parent=1 // pred_check_branch
      %19 = sbr.rel (0) target = $region13
    $region12: #{tpu_custom_call.1} parent=1 // pred_region
      _
    $region13: #{tpu_custom_call.1} parent=1 // pred_fallthru
      _
    %s20 = sld [smem:[#allocation3]]
    %s21 = sadd.s32 %s20, 0
    %v22 = vlaneseq
    %v23 = vstv %s21
    %v24 = vxor.u32 %v23, %v23
    %v25 = vxor.u32 %v24, 466688986
    %v26 = vadd.s32 %v22, %v23
    %v27 = vadd.s32 %v26, %v26
    %v28 = vshll.u32 %v26, 13
    %v29 = vshrl.u32 %v26, 19
    %v30 = vor.u32 %v28, %v29
    %v31 = vxor.u32 %v27, %v30
    %v32 = vadd.s32 %v27, %v31
    %v33 = vshll.u32 %v31, 15
    %v34 = vshrl.u32 %v31, 17
    %v35 = vor.u32 %v33, %v34
    %v36 = vxor.u32 %v32, %v35
    %v37 = vadd.s32 %v32, %v36
    %v38 = vshll.u32 %v36, 26
    %v39 = vshrl.u32 %v36, 6
    %v40 = vor.u32 %v38, %v39
    %v41 = vxor.u32 %v37, %v40
    %v42 = vadd.s32 %v37, %v41
    %v43 = vshll.u32 %v41, 6
    %v44 = vshrl.u32 %v41, 26
    %v45 = vor.u32 %v43, %v44
    %v46 = vxor.u32 %v42, %v45
    %v47 = vadd.s32 %v42, %v23
    %v48 = vadd.s32 %v46, %v25
    %v49 = vadd.s32 %v48, 1
    %v50 = vadd.s32 %v47, %v49
    %v51 = vshll.u32 %v49, 17
    %v52 = vshrl.u32 %v49, 15
    %v53 = vor.u32 %v51, %v52
    %v54 = vxor.u32 %v50, %v53
    %v55 = vadd.s32 %v50, %v54
    %v56 = vshll.u32 %v54, 29
    %v57 = vshrl.u32 %v54, 3
    %v58 = vor.u32 %v56, %v57
    %v59 = vxor.u32 %v55, %v58
    %v60 = vadd.s32 %v55, %v59
    %v61 = vshll.u32 %v59, 16
    %v62 = vshrl.u32 %v59, 16
    %v63 = vor.u32 %v61, %v62
    %v64 = vxor.u32 %v60, %v63
    %v65 = vadd.s32 %v60, %v64
    %v66 = vshll.u32 %v64, 24
    %v67 = vshrl.u32 %v64, 8
    %v68 = vor.u32 %v66, %v67
    %v69 = vxor.u32 %v65, %v68
    %v70 = vadd.s32 %v65, %v25
    %v71 = vadd.s32 %v69, %v23
    %v72 = vadd.s32 %v71, 2
    %v73 = vadd.s32 %v70, %v72
    %v74 = vshll.u32 %v72, 13
    %v75 = vshrl.u32 %v72, 19
    %v76 = vor.u32 %v74, %v75
    %v77 = vxor.u32 %v73, %v76
    %v78 = vadd.s32 %v73, %v77
    %v79 = vshll.u32 %v77, 15
    %v80 = vshrl.u32 %v77, 17
    %v81 = vor.u32 %v79, %v80
    %v82 = vxor.u32 %v78, %v81
    %v83 = vadd.s32 %v78, %v82
    %v84 = vshll.u32 %v82, 26
    %v85 = vshrl.u32 %v82, 6
    %v86 = vor.u32 %v84, %v85
    %v87 = vxor.u32 %v83, %v86
    %v88 = vadd.s32 %v83, %v87
    %v89 = vshll.u32 %v87, 6
    %v90 = vshrl.u32 %v87, 26
    %v91 = vor.u32 %v89, %v90
    %v92 = vxor.u32 %v88, %v91
    %v93 = vadd.s32 %v88, %v23
    %v94 = vadd.s32 %v92, %v23
    %v95 = vadd.s32 %v94, 3
    %v96 = vadd.s32 %v93, %v95
    %v97 = vshll.u32 %v95, 17
    %v98 = vshrl.u32 %v95, 15
    %v99 = vor.u32 %v97, %v98
    %v100 = vxor.u32 %v96, %v99
    %v101 = vadd.s32 %v96, %v100
    %v102 = vshll.u32 %v100, 29
    %v103 = vshrl.u32 %v100, 3
    %v104 = vor.u32 %v102, %v103
    %v105 = vxor.u32 %v101, %v104
    %v106 = vadd.s32 %v101, %v105
    %v107 = vshll.u32 %v105, 16
    %v108 = vshrl.u32 %v105, 16
    %v109 = vor.u32 %v107, %v108
    %v110 = vxor.u32 %v106, %v109
    %v111 = vadd.s32 %v106, %v110
    %v112 = vshll.u32 %v110, 24
    %v113 = vshrl.u32 %v110, 8
    %v114 = vor.u32 %v112, %v113
    %v115 = vxor.u32 %v111, %v114
    %v116 = vadd.s32 %v111, %v23
    %v117 = vadd.s32 %v115, %v25
    %v118 = vadd.s32 %v117, 4
    %v119 = vadd.s32 %v116, %v118
    %v120 = vshll.u32 %v118, 13
    %v121 = vshrl.u32 %v118, 19
    %v122 = vor.u32 %v120, %v121
    %v123 = vxor.u32 %v119, %v122
    %v124 = vadd.s32 %v119, %v123
    %v125 = vshll.u32 %v123, 15
    %v126 = vshrl.u32 %v123, 17
    %v127 = vor.u32 %v125, %v126
    %v128 = vxor.u32 %v124, %v127
    %v129 = vadd.s32 %v124, %v128
    %v130 = vshll.u32 %v128, 26
    %v131 = vshrl.u32 %v128, 6
    %v132 = vor.u32 %v130, %v131
    %v133 = vxor.u32 %v129, %v132
    %v134 = vadd.s32 %v129, %v133
    %v135 = vshll.u32 %v133, 6
    %v136 = vshrl.u32 %v133, 26
    %v137 = vor.u32 %v135, %v136
    %v138 = vxor.u32 %v134, %v137
    %v139 = vadd.s32 %v134, %v25
    %v140 = vadd.s32 %v138, %v23
    %v141 = vadd.s32 %v140, 5
    %v142 = vxor.u32 %v139, %v141
    %143 = set.rngseed %v142
    %v144 = vrng
    %v145 = vshrl.u32 %v144, 9
    %v146 = vor.u32 %v145, 1065353216
    %v148 = vsub.f32 %v146, 1.0
    %v149 = vmul.f32 %v148, 2.0
    %v150 = vadd.f32 %v149, -0.99999994
    %v151 = vmax.f32 %v150, -0.99999994
    %v152 = vsub.f32 0.0, %v151
    %v153 = vmul.f32 %v151, %v152
    %v154 = vadd.f32 %v153, 1.0
    %v155 = vlog2.pop %v154
    %v156 = vmul.f32 %v155, 0.6931472
    %v157 = vmul.f32 -0.5, %v153
    %v158 = vadd.f32 %v157, 1.0
    %v159 = vmul.f32 %v158, %v153
    %v160 = vand.u32 2147483647, %v153
    %vm161 = vcmp.lt.f32.partialorder %v160, 0.0004427343
    %v162 = vsel %vm161, %v159, %v156
    %v163 = vsub.f32 0.0, %v162
    %vm164 = vcmp.lt.f32.partialorder %v163, 5.0
    %v165 = vsub.f32 %v163, 2.5
    %v166 = vrsqrt.pop %v163
    %v167 = vmul.f32 %v163, %v166
    %vm168 = vcmp.eq.f32.partialorder %v163, inf
    %v169 = vsel %vm168, %v163, %v167
    %vm170 = vcmp.eq.f32.partialorder %v163, 0.0
    %v171 = vand.u32 %v163, 2147483648
    %v172 = vsel %vm170, %v171, %v169
    %v173 = vsub.f32 %v172, 3.0
    %v174 = vsel %vm164, %v165, %v173
    %v175 = vsel %vm164, 2.8102264e-08, -0.00020021426
    %v176 = vsel %vm164, 3.4327394e-07, 0.00010095056
    %v177 = vmul.f32 %v175, %v174
    %v178 = vadd.f32 %v176, %v177
    %v179 = vsel %vm164, -3.5233877e-06, 0.0013493432
    %v180 = vmul.f32 %v178, %v174
    %v181 = vadd.f32 %v179, %v180
    %v182 = vsel %vm164, -4.3915065e-06, -0.0036734284
    %v183 = vmul.f32 %v181, %v174
    %v184 = vadd.f32 %v182, %v183
    %v185 = vsel %vm164, 0.00021858087, 0.0057395077
    %v186 = vmul.f32 %v184, %v174
    %v187 = vadd.f32 %v185, %v186
    %v188 = vsel %vm164, -0.001253725, -0.0076224613
    %v189 = vmul.f32 %v187, %v174
    %v190 = vadd.f32 %v188, %v189
    %v191 = vsel %vm164, -0.0041776816, 0.0094388705
    %v192 = vmul.f32 %v190, %v174
    %v193 = vadd.f32 %v191, %v192
    %v194 = vsel %vm164, 0.24664073, 1.001674
    %v195 = vmul.f32 %v193, %v174
    %v196 = vadd.f32 %v194, %v195
    %v197 = vsel %vm164, 1.5014094, 2.8329768
    %v198 = vmul.f32 %v196, %v174
    %v199 = vadd.f32 %v197, %v198
    %v200 = vand.u32 2147483647, %v151
    %vm201 = vcmp.eq.f32.partialorder %v200, 1.0
    %v202 = vmul.f32 %v151, inf
    %v203 = vmul.f32 %v199, %v151
    %v204 = vsel %vm201, %v202, %v203
    %v205 = vmul.f32 %v204, 1.4142135
    %vm206 = vcmask 41984
    %207 = vst.msk [vmem:[#allocation6] sm:$0x3] %vm206, %v205
    %v208 = vld [vmem:[%s1] sm:$0x3]
    %v209 = vld [vmem:[%s3] sm:$0x3]
    %211 = vset.pattern.permute.xlu0 0
    %212 = vperm.xlu0 %211, %v208
    %v213 = vpop.permute.xlu0 %212
    %v215 = vmul.f32 %v213, %v209
    %v216 = vld [vmem:[%s2] sm:$0x3]
    %218 = vset.pattern.permute.xlu0 0
    %219 = vperm.xlu0 %218, %v216
    %v220 = vpop.permute.xlu0 %219
    %v222 = vmul.f32 %v220, %v205
    %v223 = vadd.f32 %v215, %v222
    %224 = vst.msk [vmem:[#allocation4] sm:$0x3] %vm206, %v223
    // Predicated region
    $region14: #{tpu_custom_call.1} parent=1 // pred_check
      _
    $region15: #{tpu_custom_call.1} parent=1 // pred_check_branch
      %226 = sbr.rel (0) target = $region17
    $region16: #{tpu_custom_call.1} parent=1 // pred_region
      %s228 = ssub.s32 32, 32
      %229 = vsyncadd [#allocation5], %s228
      %s231 = sshll.u32 [#allocation4], 4
      %s232 = int_to_ptr.vmem [resolvable:$true] %s231
      %234 = dma.vmem_to_hbm [thread:$0]  %s232, 32, %s4, [#allocation5]
    $region17: #{tpu_custom_call.1} parent=1 // pred_fallthru
      _
    // Predicated region
    $region18: #{tpu_custom_call.1} parent=1 // pred_check
      _
    $region19: #{tpu_custom_call.1} parent=1 // pred_check_branch
      %236 = sbr.rel (0) target = $region21
    $region20: #{tpu_custom_call.1} parent=1 // pred_region
      %s238 = ssub.s32 32, 32
      %239 = vsyncadd [#allocation7], %s238
      %s241 = sshll.u32 [#allocation6], 4
      %s242 = int_to_ptr.vmem [resolvable:$true] %s241
      %244 = dma.vmem_to_hbm [thread:$0]  %s242, 32, %s5, [#allocation7]
    $region21: #{tpu_custom_call.1} parent=1 // pred_fallthru
      _
    // Predicated region
    $region22: #{tpu_custom_call.1} parent=1 // pred_check
      _
    $region23: #{tpu_custom_call.1} parent=1 // pred_check_branch
      %246 = sbr.rel (0) target = $region25
    $region24: #{tpu_custom_call.1} parent=1 // pred_region
      %247 = dma.done [#allocation5], 32
    $region25: #{tpu_custom_call.1} parent=1 // pred_fallthru
      _
    // Predicated region
    $region26: #{tpu_custom_call.1} parent=1 // pred_check
      _
    $region27: #{tpu_custom_call.1} parent=1 // pred_check_branch
      %249 = sbr.rel (0) target = $region29
    $region28: #{tpu_custom_call.1} parent=1 // pred_region
      %250 = dma.done [#allocation7], 32
    $region29: #{tpu_custom_call.1} parent=1 // pred_fallthru
      _
    %251 = vsyncpa [#allocation5], 1
    %252 = vsyncpa [#allocation7], 1

// kernel: tpu_custom_call.1
$region0: #{tpu_custom_call.1}
  #allocation0 [shape = 'u32[]', space=smem, size = 0x4, offset = 0x4, fixed_abs, tag = 'smem constant byte address 0x4 - core index']
  #allocation1 [shape = 'u32[144,128]{1,0:T(1,128)}', space=vmem, size = 0x12000, scoped, tag = 'internal scratch']
  %s0 = inlined_call_operand.vmem [shape: f32[2,1], index: 0, kind: input, shape index: {}]
  %s1 = inlined_call_operand.vmem [shape: f32[2,1], index: 1, kind: input, shape index: {}]
  %s2 = inlined_call_operand.vmem [shape: f32[2,6], index: 2, kind: input, shape index: {}]
  %s3 = inlined_call_operand.vmem [shape: f32[2,6], index: 3, kind: input, shape index: {}]
  %s4 = inlined_call_operand.hbm [shape: f32[2,6], index: 4, kind: output, shape index: {}]
  %s5 = sld [smem:[#allocation0]]
  $region26: #{tpu_custom_call.1} parent=0
    _
  %s7 = ssub.s32 1, %s5
  %s8 = scalar_select 0, %s7, %s5
  $region1: #{tpu_custom_call.1} parent=0
    #allocation2 [shape = 'u8[1024]{0}', space=vmem, size = 0x400, scoped, tag = 'output window, operand 0, single buffered']
    #allocation3 [shape = 's32[1]{0}', space=sflag, size = 0x4, scoped, tag = 'scoped memory for tpu_custom_call.1']
    %9 = vsyncpa [#allocation3], 0
    // Predicated region
    $region2: #{tpu_custom_call.1} parent=1 // pred_check
      _
    $region3: #{tpu_custom_call.1} parent=1 // pred_check_branch
      %11 = sbr.rel (0) target = $region5
    $region4: #{tpu_custom_call.1} parent=1 // pred_region
      _
    $region5: #{tpu_custom_call.1} parent=1 // pred_fallthru
      _
    // Predicated region
    $region6: #{tpu_custom_call.1} parent=1 // pred_check
      _
    $region7: #{tpu_custom_call.1} parent=1 // pred_check_branch
      %13 = sbr.rel (0) target = $region9
    $region8: #{tpu_custom_call.1} parent=1 // pred_region
      _
    $region9: #{tpu_custom_call.1} parent=1 // pred_fallthru
      _
    // Predicated region
    $region10: #{tpu_custom_call.1} parent=1 // pred_check
      _
    $region11: #{tpu_custom_call.1} parent=1 // pred_check_branch
      %15 = sbr.rel (0) target = $region13
    $region12: #{tpu_custom_call.1} parent=1 // pred_region
      _
    $region13: #{tpu_custom_call.1} parent=1 // pred_fallthru
      _
    // Predicated region
    $region14: #{tpu_custom_call.1} parent=1 // pred_check
      _
    $region15: #{tpu_custom_call.1} parent=1 // pred_check_branch
      %17 = sbr.rel (0) target = $region17
    $region16: #{tpu_custom_call.1} parent=1 // pred_region
      _
    $region17: #{tpu_custom_call.1} parent=1 // pred_fallthru
      _
    %v18 = vld [vmem:[%s0] sm:$0x3]
    %v19 = vld [vmem:[%s2] sm:$0x3]
    %21 = vset.pattern.permute.xlu0 0
    %22 = vperm.xlu0 %21, %v18
    %v23 = vpop.permute.xlu0 %22
    %v25 = vmul.f32 %v23, %v19
    %v26 = vld [vmem:[%s1] sm:$0x3]
    %v27 = vld [vmem:[%s3] sm:$0x3]
    %29 = vset.pattern.permute.xlu0 0
    %30 = vperm.xlu0 %29, %v26
    %v31 = vpop.permute.xlu0 %30
    %v33 = vmul.f32 %v31, %v27
    %v34 = vadd.f32 %v25, %v33
    %vm35 = vcmask 41984
    %36 = vst.msk [vmem:[#allocation2] sm:$0x3] %vm35, %v34
    // Predicated region
    $region18: #{tpu_custom_call.1} parent=1 // pred_check
      _
    $region19: #{tpu_custom_call.1} parent=1 // pred_check_branch
      %38 = sbr.rel (0) target = $region21
    $region20: #{tpu_custom_call.1} parent=1 // pred_region
      %s40 = ssub.s32 32, 32
      %41 = vsyncadd [#allocation3], %s40
      %s43 = sshll.u32 [#allocation2], 4
      %s44 = int_to_ptr.vmem [resolvable:$true] %s43
      %46 = dma.vmem_to_hbm [thread:$0]  %s44, 32, %s4, [#allocation3]
    $region21: #{tpu_custom_call.1} parent=1 // pred_fallthru
      _
    // Predicated region
    $region22: #{tpu_custom_call.1} parent=1 // pred_check
      _
    $region23: #{tpu_custom_call.1} parent=1 // pred_check_branch
      %48 = sbr.rel (0) target = $region25
    $region24: #{tpu_custom_call.1} parent=1 // pred_region
      %49 = dma.done [#allocation3], 32
    $region25: #{tpu_custom_call.1} parent=1 // pred_fallthru
      _
    %50 = vsyncpa [#allocation3], 1

</llo_original>
